<compile_context>
chip_gen: v5e
topology: v5e:2x2
jax: 0.10.0
libtpu: 0.0.40
codegen_flags: <defaults>
</compile_context>

<pallas_src>
import jax
import jax.numpy as jnp
from jax.experimental import pallas as pl
from jax.experimental.pallas import tpu as pltpu  # noqa: F401  (TPU backend)


def _homography_kernel(m_ref, fwd_ref, inv_ref):
    """Fused Homography.forward and Homography.forward_inverse."""
    m = m_ref[...]                                   # (3, 3) f32 in VMEM

    # ---- forward: H / H[2, 2] as a reciprocal-multiply ---------------------
    denom = m[2:3, 2:3]                              # (1, 1)
    fwd_ref[0] = m * pl.reciprocal(denom)            # broadcast multiply

    # ---- forward_inverse: closed-form adjugate / determinant ---------------
    a = m[0:1, 0:1]; b = m[0:1, 1:2]; c = m[0:1, 2:3]
    d = m[1:2, 0:1]; e = m[1:2, 1:2]; f = m[1:2, 2:3]
    g = m[2:3, 0:1]; h = m[2:3, 1:2]; i = m[2:3, 2:3]

    # adjugate (cofactor matrix transposed), row-major (1, 1) entries
    adj00 = e * i - f * h
    adj01 = c * h - b * i
    adj02 = b * f - c * e
    adj10 = f * g - d * i
    adj11 = a * i - c * g
    adj12 = c * d - a * f
    adj20 = d * h - e * g
    adj21 = b * g - a * h
    adj22 = a * e - b * d

    det = a * adj00 + b * adj10 + c * adj20          # (1, 1)
    inv_det = pl.reciprocal(det)                     # exact (approx=False)

    # Assemble the 3x3 adjugate with VPU-only ops (2-D iota one-hots),
    # avoiding cross-lane shuffles / unsupported scalar-assembly patterns.
    row = jax.lax.broadcasted_iota(jnp.int32, (3, 3), 0)
    col = jax.lax.broadcasted_iota(jnp.int32, (3, 3), 1)

    def _place(val, r, c_):
        return val * ((row == r) & (col == c_)).astype(m.dtype)

    adj = (_place(adj00, 0, 0) + _place(adj01, 0, 1) + _place(adj02, 0, 2)
           + _place(adj10, 1, 0) + _place(adj11, 1, 1) + _place(adj12, 1, 2)
           + _place(adj20, 2, 0) + _place(adj21, 2, 1) + _place(adj22, 2, 2))

    inv_ref[0] = adj * inv_det


def homography_forward_and_inverse(model: jax.Array):
    """One fused pallas_call returning (forward, forward_inverse), each (1,3,3)."""
    fwd, inv = pl.pallas_call(
        _homography_kernel,
        out_shape=(jax.ShapeDtypeStruct((1, 3, 3), model.dtype),
                   jax.ShapeDtypeStruct((1, 3, 3), model.dtype)),
        in_specs=[pl.BlockSpec((3, 3), lambda: (0, 0))],
        out_specs=(pl.BlockSpec((1, 3, 3), lambda: (0, 0, 0)),
                   pl.BlockSpec((1, 3, 3), lambda: (0, 0, 0))),
    )(model)
    return fwd, inv


def homography_forward(model: jax.Array) -> jax.Array:
    """Pallas equivalent of Homography.forward(): model / model[2, 2], shape (1,3,3)."""
    return homography_forward_and_inverse(model)[0]


def homography_forward_inverse(model: jax.Array) -> jax.Array:
    """Pallas equivalent of Homography.forward_inverse(): inv(model), shape (1,3,3)."""
    return homography_forward_and_inverse(model)[1]


if __name__ == "__main__":
    # Deterministic parameter: identity (as in reset_model) plus a small
    # deterministic perturbation so normalization / inversion are non-trivial.
    key = jax.random.PRNGKey(0)
    model = jnp.eye(3, dtype=jnp.float32) + 0.1 * jax.random.normal(
        key, (3, 3), dtype=jnp.float32
    )

    fwd, inv = homography_forward_and_inverse(model)
    (fwd, inv) = jax.block_until_ready((fwd, inv))

    # Reference check against plain-JAX semantics of the PyTorch module.
    ref_fwd = (model / model[2, 2])[None, :, :]
    ref_inv = jnp.linalg.inv(model)[None, :, :]

    assert fwd.shape == (1, 3, 3), fwd.shape
    assert inv.shape == (1, 3, 3), inv.shape
    assert jnp.allclose(fwd, ref_fwd, atol=1e-6, rtol=1e-6), (fwd, ref_fwd)
    assert jnp.allclose(inv, ref_inv, atol=1e-5, rtol=1e-5), (inv, ref_inv)
    # Sanity: H @ H^-1 ~= I
    assert jnp.allclose(model @ inv[0], jnp.eye(3, dtype=jnp.float32),
                        atol=1e-5, rtol=1e-5)

    print("KERNEL_OK")
</pallas_src>

<mosaic_0001>
module attributes {stable_mosaic.version = 11 : i64} {
  func.func @_homography_kernel(%arg0: memref<3x3xf32, #tpu.memory_space<vmem>>, %arg1: memref<1x3x3xf32, #tpu.memory_space<vmem>>, %arg2: memref<1x3x3xf32, #tpu.memory_space<vmem>>) attributes {dimension_semantics = [], scalar_prefetch = 0 : i64, scratch_operands = 0 : i64, tpu.core_type = #tpu.core_type<tc>} {
    %c0 = arith.constant 0 : index
    %c0_0 = arith.constant 0 : index
    %0 = vector.load %arg0[%c0, %c0_0] : memref<3x3xf32, #tpu.memory_space<vmem>>, vector<3x3xf32>
    %1 = vector.extract_strided_slice %0 {offsets = [2, 2], sizes = [1, 1], strides = [1, 1]} : vector<3x3xf32> to vector<1x1xf32>
    %2 = tpu.reciprocal %1 : vector<1x1xf32> -> vector<1x1xf32>
    %3 = vector.broadcast %2 : vector<1x1xf32> to vector<3x3xf32>
    %4 = arith.mulf %0, %3 : vector<3x3xf32>
    %c0_1 = arith.constant 0 : index
    %c0_2 = arith.constant 0 : index
    %c0_3 = arith.constant 0 : index
    %5 = vector.load %arg1[%c0_1, %c0_2, %c0_3] : memref<1x3x3xf32, #tpu.memory_space<vmem>>, vector<1x3x3xf32>
    %6 = vector.shape_cast %5 : vector<1x3x3xf32> to vector<3x3xf32>
    %7 = vector.shape_cast %4 : vector<3x3xf32> to vector<1x3x3xf32>
    tpu.vector_store %arg1[%c0_1, %c0_2, %c0_3], %7 {strides = array<i32>} : memref<1x3x3xf32, #tpu.memory_space<vmem>>, vector<1x3x3xf32>,
    %8 = vector.extract_strided_slice %0 {offsets = [0, 0], sizes = [1, 1], strides = [1, 1]} : vector<3x3xf32> to vector<1x1xf32>
    %9 = vector.extract_strided_slice %0 {offsets = [0, 1], sizes = [1, 1], strides = [1, 1]} : vector<3x3xf32> to vector<1x1xf32>
    %10 = vector.extract_strided_slice %0 {offsets = [0, 2], sizes = [1, 1], strides = [1, 1]} : vector<3x3xf32> to vector<1x1xf32>
    %11 = vector.extract_strided_slice %0 {offsets = [1, 0], sizes = [1, 1], strides = [1, 1]} : vector<3x3xf32> to vector<1x1xf32>
    %12 = vector.extract_strided_slice %0 {offsets = [1, 1], sizes = [1, 1], strides = [1, 1]} : vector<3x3xf32> to vector<1x1xf32>
    %13 = vector.extract_strided_slice %0 {offsets = [1, 2], sizes = [1, 1], strides = [1, 1]} : vector<3x3xf32> to vector<1x1xf32>
    %14 = vector.extract_strided_slice %0 {offsets = [2, 0], sizes = [1, 1], strides = [1, 1]} : vector<3x3xf32> to vector<1x1xf32>
    %15 = vector.extract_strided_slice %0 {offsets = [2, 1], sizes = [1, 1], strides = [1, 1]} : vector<3x3xf32> to vector<1x1xf32>
    %16 = vector.extract_strided_slice %0 {offsets = [2, 2], sizes = [1, 1], strides = [1, 1]} : vector<3x3xf32> to vector<1x1xf32>
    %17 = arith.mulf %12, %16 : vector<1x1xf32>
    %18 = arith.mulf %13, %15 : vector<1x1xf32>
    %19 = arith.subf %17, %18 : vector<1x1xf32>
    %20 = arith.mulf %10, %15 : vector<1x1xf32>
    %21 = arith.mulf %9, %16 : vector<1x1xf32>
    %22 = arith.subf %20, %21 : vector<1x1xf32>
    %23 = arith.mulf %9, %13 : vector<1x1xf32>
    %24 = arith.mulf %10, %12 : vector<1x1xf32>
    %25 = arith.subf %23, %24 : vector<1x1xf32>
    %26 = arith.mulf %13, %14 : vector<1x1xf32>
    %27 = arith.mulf %11, %16 : vector<1x1xf32>
    %28 = arith.subf %26, %27 : vector<1x1xf32>
    %29 = arith.mulf %8, %16 : vector<1x1xf32>
    %30 = arith.mulf %10, %14 : vector<1x1xf32>
    %31 = arith.subf %29, %30 : vector<1x1xf32>
    %32 = arith.mulf %10, %11 : vector<1x1xf32>
    %33 = arith.mulf %8, %13 : vector<1x1xf32>
    %34 = arith.subf %32, %33 : vector<1x1xf32>
    %35 = arith.mulf %11, %15 : vector<1x1xf32>
    %36 = arith.mulf %12, %14 : vector<1x1xf32>
    %37 = arith.subf %35, %36 : vector<1x1xf32>
    %38 = arith.mulf %9, %14 : vector<1x1xf32>
    %39 = arith.mulf %8, %15 : vector<1x1xf32>
    %40 = arith.subf %38, %39 : vector<1x1xf32>
    %41 = arith.mulf %8, %12 : vector<1x1xf32>
    %42 = arith.mulf %9, %11 : vector<1x1xf32>
    %43 = arith.subf %41, %42 : vector<1x1xf32>
    %44 = arith.mulf %8, %19 : vector<1x1xf32>
    %45 = arith.mulf %9, %28 : vector<1x1xf32>
    %46 = arith.addf %44, %45 : vector<1x1xf32>
    %47 = arith.mulf %10, %37 : vector<1x1xf32>
    %48 = arith.addf %46, %47 : vector<1x1xf32>
    %49 = tpu.reciprocal %48 : vector<1x1xf32> -> vector<1x1xf32>
    %50 = tpu.iota {dimensions = array<i32: 0>} : vector<3x3xi32>
    %51 = tpu.iota {dimensions = array<i32: 1>} : vector<3x3xi32>
    %c0_i32 = arith.constant 0 : i32
    %52 = vector.broadcast %c0_i32 : i32 to vector<3x3xi32>
    %53 = arith.cmpi eq, %50, %52 : vector<3x3xi32>
    %c0_i32_4 = arith.constant 0 : i32
    %54 = vector.broadcast %c0_i32_4 : i32 to vector<3x3xi32>
    %55 = arith.cmpi eq, %51, %54 : vector<3x3xi32>
    %56 = arith.andi %53, %55 : vector<3x3xi1>
    %57 = arith.extui %56 : vector<3x3xi1> to vector<3x3xi32>
    %58 = arith.sitofp %57 : vector<3x3xi32> to vector<3x3xf32>
    %59 = vector.broadcast %19 : vector<1x1xf32> to vector<3x3xf32>
    %60 = arith.mulf %59, %58 : vector<3x3xf32>
    %c0_i32_5 = arith.constant 0 : i32
    %61 = vector.broadcast %c0_i32_5 : i32 to vector<3x3xi32>
    %62 = arith.cmpi eq, %50, %61 : vector<3x3xi32>
    %c1_i32 = arith.constant 1 : i32
    %63 = vector.broadcast %c1_i32 : i32 to vector<3x3xi32>
    %64 = arith.cmpi eq, %51, %63 : vector<3x3xi32>
    %65 = arith.andi %62, %64 : vector<3x3xi1>
    %66 = arith.extui %65 : vector<3x3xi1> to vector<3x3xi32>
    %67 = arith.sitofp %66 : vector<3x3xi32> to vector<3x3xf32>
    %68 = vector.broadcast %22 : vector<1x1xf32> to vector<3x3xf32>
    %69 = arith.mulf %68, %67 : vector<3x3xf32>
    %70 = arith.addf %60, %69 : vector<3x3xf32>
    %c0_i32_6 = arith.constant 0 : i32
    %71 = vector.broadcast %c0_i32_6 : i32 to vector<3x3xi32>
    %72 = arith.cmpi eq, %50, %71 : vector<3x3xi32>
    %c2_i32 = arith.constant 2 : i32
    %73 = vector.broadcast %c2_i32 : i32 to vector<3x3xi32>
    %74 = arith.cmpi eq, %51, %73 : vector<3x3xi32>
    %75 = arith.andi %72, %74 : vector<3x3xi1>
    %76 = arith.extui %75 : vector<3x3xi1> to vector<3x3xi32>
    %77 = arith.sitofp %76 : vector<3x3xi32> to vector<3x3xf32>
    %78 = vector.broadcast %25 : vector<1x1xf32> to vector<3x3xf32>
    %79 = arith.mulf %78, %77 : vector<3x3xf32>
    %80 = arith.addf %70, %79 : vector<3x3xf32>
    %c1_i32_7 = arith.constant 1 : i32
    %81 = vector.broadcast %c1_i32_7 : i32 to vector<3x3xi32>
    %82 = arith.cmpi eq, %50, %81 : vector<3x3xi32>
    %c0_i32_8 = arith.constant 0 : i32
    %83 = vector.broadcast %c0_i32_8 : i32 to vector<3x3xi32>
    %84 = arith.cmpi eq, %51, %83 : vector<3x3xi32>
    %85 = arith.andi %82, %84 : vector<3x3xi1>
    %86 = arith.extui %85 : vector<3x3xi1> to vector<3x3xi32>
    %87 = arith.sitofp %86 : vector<3x3xi32> to vector<3x3xf32>
    %88 = vector.broadcast %28 : vector<1x1xf32> to vector<3x3xf32>
    %89 = arith.mulf %88, %87 : vector<3x3xf32>
    %90 = arith.addf %80, %89 : vector<3x3xf32>
    %c1_i32_9 = arith.constant 1 : i32
    %91 = vector.broadcast %c1_i32_9 : i32 to vector<3x3xi32>
    %92 = arith.cmpi eq, %50, %91 : vector<3x3xi32>
    %c1_i32_10 = arith.constant 1 : i32
    %93 = vector.broadcast %c1_i32_10 : i32 to vector<3x3xi32>
    %94 = arith.cmpi eq, %51, %93 : vector<3x3xi32>
    %95 = arith.andi %92, %94 : vector<3x3xi1>
    %96 = arith.extui %95 : vector<3x3xi1> to vector<3x3xi32>
    %97 = arith.sitofp %96 : vector<3x3xi32> to vector<3x3xf32>
    %98 = vector.broadcast %31 : vector<1x1xf32> to vector<3x3xf32>
    %99 = arith.mulf %98, %97 : vector<3x3xf32>
    %100 = arith.addf %90, %99 : vector<3x3xf32>
    %c1_i32_11 = arith.constant 1 : i32
    %101 = vector.broadcast %c1_i32_11 : i32 to vector<3x3xi32>
    %102 = arith.cmpi eq, %50, %101 : vector<3x3xi32>
    %c2_i32_12 = arith.constant 2 : i32
    %103 = vector.broadcast %c2_i32_12 : i32 to vector<3x3xi32>
    %104 = arith.cmpi eq, %51, %103 : vector<3x3xi32>
    %105 = arith.andi %102, %104 : vector<3x3xi1>
    %106 = arith.extui %105 : vector<3x3xi1> to vector<3x3xi32>
    %107 = arith.sitofp %106 : vector<3x3xi32> to vector<3x3xf32>
    %108 = vector.broadcast %34 : vector<1x1xf32> to vector<3x3xf32>
    %109 = arith.mulf %108, %107 : vector<3x3xf32>
    %110 = arith.addf %100, %109 : vector<3x3xf32>
    %c2_i32_13 = arith.constant 2 : i32
    %111 = vector.broadcast %c2_i32_13 : i32 to vector<3x3xi32>
    %112 = arith.cmpi eq, %50, %111 : vector<3x3xi32>
    %c0_i32_14 = arith.constant 0 : i32
    %113 = vector.broadcast %c0_i32_14 : i32 to vector<3x3xi32>
    %114 = arith.cmpi eq, %51, %113 : vector<3x3xi32>
    %115 = arith.andi %112, %114 : vector<3x3xi1>
    %116 = arith.extui %115 : vector<3x3xi1> to vector<3x3xi32>
    %117 = arith.sitofp %116 : vector<3x3xi32> to vector<3x3xf32>
    %118 = vector.broadcast %37 : vector<1x1xf32> to vector<3x3xf32>
    %119 = arith.mulf %118, %117 : vector<3x3xf32>
    %120 = arith.addf %110, %119 : vector<3x3xf32>
    %c2_i32_15 = arith.constant 2 : i32
    %121 = vector.broadcast %c2_i32_15 : i32 to vector<3x3xi32>
    %122 = arith.cmpi eq, %50, %121 : vector<3x3xi32>
    %c1_i32_16 = arith.constant 1 : i32
    %123 = vector.broadcast %c1_i32_16 : i32 to vector<3x3xi32>
    %124 = arith.cmpi eq, %51, %123 : vector<3x3xi32>
    %125 = arith.andi %122, %124 : vector<3x3xi1>
    %126 = arith.extui %125 : vector<3x3xi1> to vector<3x3xi32>
    %127 = arith.sitofp %126 : vector<3x3xi32> to vector<3x3xf32>
    %128 = vector.broadcast %40 : vector<1x1xf32> to vector<3x3xf32>
    %129 = arith.mulf %128, %127 : vector<3x3xf32>
    %130 = arith.addf %120, %129 : vector<3x3xf32>
    %c2_i32_17 = arith.constant 2 : i32
    %131 = vector.broadcast %c2_i32_17 : i32 to vector<3x3xi32>
    %132 = arith.cmpi eq, %50, %131 : vector<3x3xi32>
    %c2_i32_18 = arith.constant 2 : i32
    %133 = vector.broadcast %c2_i32_18 : i32 to vector<3x3xi32>
    %134 = arith.cmpi eq, %51, %133 : vector<3x3xi32>
    %135 = arith.andi %132, %134 : vector<3x3xi1>
    %136 = arith.extui %135 : vector<3x3xi1> to vector<3x3xi32>
    %137 = arith.sitofp %136 : vector<3x3xi32> to vector<3x3xf32>
    %138 = vector.broadcast %43 : vector<1x1xf32> to vector<3x3xf32>
    %139 = arith.mulf %138, %137 : vector<3x3xf32>
    %140 = arith.addf %130, %139 : vector<3x3xf32>
    %141 = vector.broadcast %49 : vector<1x1xf32> to vector<3x3xf32>
    %142 = arith.mulf %140, %141 : vector<3x3xf32>
    %c0_19 = arith.constant 0 : index
    %c0_20 = arith.constant 0 : index
    %c0_21 = arith.constant 0 : index
    %143 = vector.load %arg2[%c0_19, %c0_20, %c0_21] : memref<1x3x3xf32, #tpu.memory_space<vmem>>, vector<1x3x3xf32>
    %144 = vector.shape_cast %143 : vector<1x3x3xf32> to vector<3x3xf32>
    %145 = vector.shape_cast %142 : vector<3x3xf32> to vector<1x3x3xf32>
    tpu.vector_store %arg2[%c0_19, %c0_20, %c0_21], %145 {strides = array<i32>} : memref<1x3x3xf32, #tpu.memory_space<vmem>>, vector<1x3x3xf32>,
    return
  }
}

</mosaic_0001>

<llo_original>
// kernel: tpu_custom_call.1
$region0: #{tpu_custom_call.1}
  #allocation0 [shape = 'u32[]', space=smem, size = 0x4, offset = 0x4, fixed_abs, tag = 'smem constant byte address 0x4 - core index']
  #allocation1 [shape = 'u32[72,128]{1,0:T(1,128)}', space=vmem, size = 0x9000, scoped, tag = 'internal scratch']
  %s0 = inlined_call_operand.hbm [shape: f32[3,3], index: 0, kind: input, shape index: {}]
  %s1 = inlined_call_operand.vmem [shape: f32[1,3,3], index: 1, kind: output, shape index: {0}]
  %s2 = inlined_call_operand.vmem [shape: f32[1,3,3], index: 2, kind: output, shape index: {1}]
  %3 = xla_tuple %s1, %s2
  %s4 = sld [smem:[#allocation0]]
  $region26: #{tpu_custom_call.1} parent=0
    _
  %s6 = ssub.s32 1, %s4
  %s7 = scalar_select 0, %s6, %s4
  $region1: #{tpu_custom_call.1} parent=0
    #allocation2 [shape = 'u8[2048]{0}', space=vmem, size = 0x800, scoped, tag = 'input window, operand 0, single buffered']
    #allocation3 [shape = 's32[1]{0}', space=sflag, size = 0x4, scoped, tag = 'scoped memory for tpu_custom_call.1']
    %8 = vsyncpa [#allocation3], 0
    // Predicated region
    $region2: #{tpu_custom_call.1} parent=1 // pred_check
      _
    $region3: #{tpu_custom_call.1} parent=1 // pred_check_branch
      %10 = sbr.rel (0) target = $region5
    $region4: #{tpu_custom_call.1} parent=1 // pred_region
      %12 = vsyncadd [#allocation3], 0
      %s14 = sshll.u32 %s0, 4
      %s15 = int_to_ptr.hbm [resolvable:$true] %s14
      %s16 = sshll.u32 [#allocation2], 4
      %s17 = int_to_ptr.vmem [resolvable:$true] %s16
      %19 = dma.hbm_to_vmem [thread:$0]  %s15, 64, %s17, [#allocation3]
    $region5: #{tpu_custom_call.1} parent=1 // pred_fallthru
      _
    // Predicated region
    $region6: #{tpu_custom_call.1} parent=1 // pred_check
      _
    $region7: #{tpu_custom_call.1} parent=1 // pred_check_branch
      %21 = sbr.rel (0) target = $region9
    $region8: #{tpu_custom_call.1} parent=1 // pred_region
      %23 = dma.done [#allocation3], 64
    $region9: #{tpu_custom_call.1} parent=1 // pred_fallthru
      _
    %v24 = vld [vmem:[#allocation2] sm:$0x7]
    %v25 = vrcp.pop %v24
    %v26 = vmul.f32 %v24, %v25
    %v27 = vsub.f32 1.0, %v26
    %v28 = vmul.f32 %v25, %v27
    %v29 = vadd.f32 %v25, %v28
    %vm30 = vweird.f32 %v24
    %vm31 = vweird.f32 %v25
    %vm32 = vmor %vm30, %vm31
    %v33 = vsel %vm32, %v25, %v29
    %v34 = vand.u32 2147483647, %v24
    %vm35 = vcmp.eq.f32.partialorder %v34, 8.507059e+37
    %v36 = vand.u32 %v24, 2147483648
    %v37 = vor.u32 1.1754944e-38, %v36
    %v38 = vsel %vm35, %v37, %v33
    %v40 = vrot.slane %v38, 2
    %41 = vrot.lane.b32.xlu0 %v40, 126
    %v42 = vpop.permute.xlu0 %41
    %s43 = vtos %v42
    %v44 = vstv %s43
    %v46 = vmul.f32 %v24, %v44
    %vm47 = vcmask 18432
    %48 = vst.msk [vmem:[%s1] sm:$0x7] %vm47, %v46
    %v50 = vrot.slane %v24, 1
    %51 = vrot.lane.b32.xlu0 %v50, 127
    %v52 = vpop.permute.xlu0 %51
    %v54 = vmul.f32 %v24, %v52
    %55 = vrot.lane.b32.xlu0 %v50, 1
    %v56 = vpop.permute.xlu0 %55
    %v58 = vmul.f32 %v24, %v56
    %60 = vrot.lane.b32.xlu0 %v58, 127
    %v61 = vpop.permute.xlu0 %60
    %v63 = vsub.f32 %v54, %v61
    %v64 = vrot.slane %v24, 2
    %65 = vrot.lane.b32.xlu0 %v64, 1
    %v66 = vpop.permute.xlu0 %65
    %v68 = vmul.f32 %v24, %v66
    %69 = vrot.lane.b32.xlu0 %v64, 127
    %v70 = vpop.permute.xlu0 %69
    %v72 = vmul.f32 %v24, %v70
    %74 = vrot.lane.b32.xlu0 %v72, 1
    %v75 = vpop.permute.xlu0 %74
    %v77 = vsub.f32 %v68, %v75
    %78 = vrot.lane.b32.xlu0 %v50, 2
    %v79 = vpop.permute.xlu0 %78
    %v81 = vmul.f32 %v24, %v79
    %82 = vrot.lane.b32.xlu0 %v50, 126
    %v83 = vpop.permute.xlu0 %82
    %v85 = vmul.f32 %v24, %v83
    %87 = vrot.lane.b32.xlu0 %v85, 2
    %v88 = vpop.permute.xlu0 %87
    %v90 = vsub.f32 %v81, %v88
    %91 = vrot.lane.b32.xlu0 %v64, 126
    %v92 = vpop.permute.xlu0 %91
    %v94 = vmul.f32 %v24, %v92
    %95 = vrot.lane.b32.xlu0 %v64, 2
    %v96 = vpop.permute.xlu0 %95
    %v98 = vmul.f32 %v24, %v96
    %100 = vrot.lane.b32.xlu0 %v98, 126
    %v101 = vpop.permute.xlu0 %100
    %v103 = vsub.f32 %v94, %v101
    %v105 = vrot.slane %v63, 1
    %106 = vrot.lane.b32.xlu0 %v105, 127
    %v107 = vpop.permute.xlu0 %106
    %v109 = vmul.f32 %v24, %v107
    %v111 = vrot.slane %v90, 1
    %112 = vrot.lane.b32.xlu0 %v111, 127
    %v113 = vpop.permute.xlu0 %112
    %v115 = vmul.f32 %v24, %v113
    %117 = vrot.lane.b32.xlu0 %v115, 127
    %v118 = vpop.permute.xlu0 %117
    %v120 = vadd.f32 %v109, %v118
    %121 = vrot.lane.b32.xlu0 %v105, 2
    %v122 = vpop.permute.xlu0 %121
    %v124 = vmul.f32 %v24, %v122
    %126 = vrot.lane.b32.xlu0 %v124, 126
    %v127 = vpop.permute.xlu0 %126
    %v129 = vadd.f32 %v120, %v127
    %v130 = vrcp.pop %v129
    %v131 = vmul.f32 %v129, %v130
    %v132 = vsub.f32 1.0, %v131
    %v133 = vmul.f32 %v130, %v132
    %v134 = vadd.f32 %v130, %v133
    %vm135 = vweird.f32 %v129
    %vm136 = vweird.f32 %v130
    %vm137 = vmor %vm135, %vm136
    %v138 = vsel %vm137, %v130, %v134
    %v139 = vand.u32 2147483647, %v129
    %vm140 = vcmp.eq.f32.partialorder %v139, 8.507059e+37
    %v141 = vand.u32 %v129, 2147483648
    %v142 = vor.u32 1.1754944e-38, %v141
    %v143 = vsel %vm140, %v142, %v138
    %v144 = vlaneseq
    %v145 = vshrl.u32 %v144, 7
    %v146 = vlaneseq
    %v147 = vand.u32 %v146, 127
    %vm148 = vcmp.eq.s32.totalorder %v145, 0
    %vm149 = vcmp.eq.s32.totalorder %v147, 0
    %vm150 = vmand %vm148, %vm149
    %v151 = vsel %vm150, 1, 0
    %v152 = vcvt.s32.f32 %v151
    %s153 = vtos %v107
    %v154 = vstv %s153
    %v156 = vmul.f32 %v154, %v152
    %vm157 = vcmp.eq.s32.totalorder %v147, 1
    %vm158 = vmand %vm148, %vm157
    %v159 = vsel %vm158, 1, 0
    %v160 = vcvt.s32.f32 %v159
    %162 = vrot.lane.b32.xlu0 %v77, 126
    %v163 = vpop.permute.xlu0 %162
    %s164 = vtos %v163
    %v165 = vstv %s164
    %v167 = vmul.f32 %v165, %v160
    %v168 = vadd.f32 %v156, %v167
    %vm169 = vcmp.eq.s32.totalorder %v147, 2
    %vm170 = vmand %vm148, %vm169
    %v171 = vsel %vm170, 1, 0
    %v172 = vcvt.s32.f32 %v171
    %173 = vrot.lane.b32.xlu0 %v63, 127
    %v174 = vpop.permute.xlu0 %173
    %s175 = vtos %v174
    %v176 = vstv %s175
    %v178 = vmul.f32 %v176, %v172
    %v179 = vadd.f32 %v168, %v178
    %vm180 = vcmp.eq.s32.totalorder %v145, 1
    %vm181 = vmand %vm180, %vm149
    %v182 = vsel %vm181, 1, 0
    %v183 = vcvt.s32.f32 %v182
    %184 = vrot.lane.b32.xlu0 %v111, 126
    %v185 = vpop.permute.xlu0 %184
    %s186 = vtos %v185
    %v187 = vstv %s186
    %v189 = vmul.f32 %v187, %v183
    %v190 = vadd.f32 %v179, %v189
    %vm191 = vmand %vm180, %vm157
    %v192 = vsel %vm191, 1, 0
    %v193 = vcvt.s32.f32 %v192
    %s195 = vtos %v103
    %v196 = vstv %s195
    %v198 = vmul.f32 %v196, %v193
    %v199 = vadd.f32 %v190, %v198
    %vm200 = vmand %vm180, %vm169
    %v201 = vsel %vm200, 1, 0
    %v202 = vcvt.s32.f32 %v201
    %203 = vrot.lane.b32.xlu0 %v90, 126
    %v204 = vpop.permute.xlu0 %203
    %s205 = vtos %v204
    %v206 = vstv %s205
    %v208 = vmul.f32 %v206, %v202
    %v209 = vadd.f32 %v199, %v208
    %vm210 = vcmp.eq.s32.totalorder %v145, 2
    %vm211 = vmand %vm210, %vm149
    %v212 = vsel %vm211, 1, 0
    %v213 = vcvt.s32.f32 %v212
    %s214 = vtos %v105
    %v215 = vstv %s214
    %v217 = vmul.f32 %v215, %v213
    %v218 = vadd.f32 %v209, %v217
    %vm219 = vmand %vm210, %vm157
    %v220 = vsel %vm219, 1, 0
    %v221 = vcvt.s32.f32 %v220
    %222 = vrot.lane.b32.xlu0 %v77, 127
    %v223 = vpop.permute.xlu0 %222
    %s224 = vtos %v223
    %v225 = vstv %s224
    %v227 = vmul.f32 %v225, %v221
    %v228 = vadd.f32 %v218, %v227
    %vm229 = vmand %vm210, %vm169
    %v230 = vsel %vm229, 1, 0
    %v231 = vcvt.s32.f32 %v230
    %s232 = vtos %v63
    %v233 = vstv %s232
    %v235 = vmul.f32 %v233, %v231
    %v236 = vadd.f32 %v228, %v235
    %s238 = vtos %v143
    %v239 = vstv %s238
    %v241 = vmul.f32 %v236, %v239
    %242 = vst.msk [vmem:[%s2] sm:$0x7] %vm47, %v241
    // Predicated region
    $region10: #{tpu_custom_call.1} parent=1 // pred_check
      _
    $region11: #{tpu_custom_call.1} parent=1 // pred_check_branch
      %244 = sbr.rel (0) target = $region13
    $region12: #{tpu_custom_call.1} parent=1 // pred_region
      _
    $region13: #{tpu_custom_call.1} parent=1 // pred_fallthru
      _
    // Predicated region
    $region14: #{tpu_custom_call.1} parent=1 // pred_check
      _
    $region15: #{tpu_custom_call.1} parent=1 // pred_check_branch
      %246 = sbr.rel (0) target = $region17
    $region16: #{tpu_custom_call.1} parent=1 // pred_region
      _
    $region17: #{tpu_custom_call.1} parent=1 // pred_fallthru
      _
    // Predicated region
    $region18: #{tpu_custom_call.1} parent=1 // pred_check
      _
    $region19: #{tpu_custom_call.1} parent=1 // pred_check_branch
      %248 = sbr.rel (0) target = $region21
    $region20: #{tpu_custom_call.1} parent=1 // pred_region
      _
    $region21: #{tpu_custom_call.1} parent=1 // pred_fallthru
      _
    // Predicated region
    $region22: #{tpu_custom_call.1} parent=1 // pred_check
      _
    $region23: #{tpu_custom_call.1} parent=1 // pred_check_branch
      %250 = sbr.rel (0) target = $region25
    $region24: #{tpu_custom_call.1} parent=1 // pred_region
      _
    $region25: #{tpu_custom_call.1} parent=1 // pred_fallthru
      _
    %251 = vsyncpa [#allocation3], 1

</llo_original>
